<compile_context>
chip_gen: v7x
topology: tpu7x:2x2x1
jax: 0.10.0
libtpu: 0.0.40
codegen_flags: <defaults>
</compile_context>

<pallas_src>
import functools

import jax
import jax.numpy as jnp
from jax import lax
from jax.experimental import pallas as pl
from jax.experimental.pallas import tpu as pltpu

TAU = 0.04


def _logitnorm_rowloss_kernel(logits_ref, labels_ref, out_ref, *, inv_tau,
                              n_total, tile_n):
    x = logits_ref[...].astype(jnp.float32)            # (T, C)
    labels = labels_ref[...]                            # (T, 1) int32

    # Mask for padded tail rows of the last (ragged) tile.
    row0 = pl.program_id(0) * tile_n
    row_ids = row0 + lax.broadcasted_iota(jnp.int32, (tile_n, 1), 0)
    valid = row_ids < n_total                            # (T, 1) bool

    # F.normalize(logits, p=2, dim=1): x / max(norm, 1e-12)
    # -> per-row reciprocal + per-element multiply (no N*C divide).
    sq = jnp.sum(x * x, axis=1, keepdims=True)           # (T, 1)
    norm = jnp.maximum(jnp.sqrt(sq), 1e-12)
    inv_norm = 1.0 / norm                                 # per-row EUP op
    magnitude = x * inv_norm                              # (T, C)

    # logit_norm / tau = (x * (1/tau)) / (magnitude + 1e-7)
    # (single per-element divide; tau folded into a constant multiply)
    s = (x * inv_tau) / (magnitude + 1e-7)                # (T, C)

    # Stable per-row log-sum-exp.
    m = jnp.max(s, axis=1, keepdims=True)                 # (T, 1)
    lse = m + jnp.log(jnp.sum(jnp.exp(s - m), axis=1, keepdims=True))

    # Picked (label) logit, fused select + sum (no explicit one-hot multiply).
    col = lax.broadcasted_iota(jnp.int32, s.shape, 1)     # (T, C)
    picked = jnp.sum(jnp.where(col == labels, s, 0.0), axis=1, keepdims=True)

    loss_per_row = lse - picked                            # (T, 1)
    out_ref[...] = jnp.where(valid, loss_per_row, 0.0)


def _choose_tile_n(n, c, itemsize):
    """Largest row tile such that a double-buffered input block stays ~8 MiB."""
    budget_bytes = 4 * 1024 * 1024                 # per input buffer (x2 dbl-buf)
    max_rows = max(16, budget_bytes // max(1, c * itemsize))
    tile = min(1024, max_rows)
    if tile >= n:
        return n                                   # single full-extent block
    return max(16, (tile // 16) * 16)              # sublane-safe for f32 & bf16


def logitnorm_loss(logits, labels, tau=TAU, tile_n=None):
    """logits: (N, C) float32/bfloat16, labels: (N,) int -> scalar f32 loss."""
    n, c = logits.shape
    labels2d = labels.astype(jnp.int32).reshape(n, 1)

    if tile_n is None:
        tile_n = _choose_tile_n(n, c, jnp.dtype(logits.dtype).itemsize)
    tile_n = min(tile_n, n)
    num_tiles = pl.cdiv(n, tile_n)

    per_row = pl.pallas_call(
        functools.partial(_logitnorm_rowloss_kernel,
                          inv_tau=1.0 / tau, n_total=n, tile_n=tile_n),
        out_shape=jax.ShapeDtypeStruct((n, 1), jnp.float32),
        grid=(num_tiles,),
        in_specs=[
            pl.BlockSpec((tile_n, c), lambda i: (i, 0)),   # logits row tile
            pl.BlockSpec((tile_n, 1), lambda i: (i, 0)),   # labels row tile
        ],
        out_specs=pl.BlockSpec((tile_n, 1), lambda i: (i, 0)),
        compiler_params=pltpu.CompilerParams(
            dimension_semantics=("parallel",),             # independent row tiles
            vmem_limit_bytes=32 * 1024 * 1024,
        ),
    )(logits, labels2d)

    # Mean reduction over the true batch size (padded rows were written as 0
    # only inside the kernel and are never stored past row n anyway).
    return jnp.sum(per_row) / n


def _reference_loss(logits, labels, tau=TAU):
    # Plain-JAX mirror of the PyTorch forward, for a sanity check.
    x = logits.astype(jnp.float32)
    norm = jnp.maximum(jnp.linalg.norm(x, axis=1, keepdims=True), 1e-12)
    magnitude = x / norm
    z = x / (magnitude + 1e-7)
    s = z / tau
    lse = jax.scipy.special.logsumexp(s, axis=1)
    picked = jnp.take_along_axis(s, labels[:, None], axis=1)[:, 0]
    return jnp.mean(lse - picked)


if __name__ == "__main__":
    key = jax.random.PRNGKey(0)
    k1, k2 = jax.random.split(key)

    N, C = 20, 32  # small (batch, num_classes); N is NOT a multiple of the tile
    logits = jax.random.normal(k1, (N, C), dtype=jnp.float32)
    labels = jax.random.randint(k2, (N,), 0, C, dtype=jnp.int32)

    ref = jax.block_until_ready(_reference_loss(logits, labels))

    # Tiled path: grid of 3 row tiles, ragged last tile.
    loss_tiled = jax.block_until_ready(logitnorm_loss(logits, labels, tile_n=8))
    assert jnp.allclose(loss_tiled, ref, rtol=1e-4, atol=1e-4), (loss_tiled, ref)

    # Auto-tile path (single full-extent block for this small shape).
    loss_auto = jax.block_until_ready(logitnorm_loss(logits, labels))
    assert jnp.allclose(loss_auto, ref, rtol=1e-4, atol=1e-4), (loss_auto, ref)

    print("KERNEL_OK")
</pallas_src>

<mosaic_0001>
module attributes {stable_mosaic.version = 11 : i64} {
  func.func @_logitnorm_rowloss_kernel(%arg0: i32, %arg1: memref<8x32xf32, #tpu.memory_space<vmem>>, %arg2: memref<8x1xi32, #tpu.memory_space<vmem>>, %arg3: memref<8x1xf32, #tpu.memory_space<vmem>>) attributes {dimension_semantics = [#tpu.dimension_semantics<parallel>], iteration_bounds = array<i64: 3>, scalar_prefetch = 0 : i64, scratch_operands = 0 : i64, tpu.core_type = #tpu.core_type<tc>, window_params = [{transform_indices = @transform_0, window_bounds = array<i64: 8, 32>}, {transform_indices = @transform_1, window_bounds = array<i64: 8, 1>}, {transform_indices = @transform_2, window_bounds = array<i64: 8, 1>}]} {
    %c0 = arith.constant 0 : index
    %c0_0 = arith.constant 0 : index
    %0 = vector.load %arg1[%c0, %c0_0] : memref<8x32xf32, #tpu.memory_space<vmem>>, vector<8x32xf32>
    %c0_1 = arith.constant 0 : index
    %c0_2 = arith.constant 0 : index
    %1 = vector.load %arg2[%c0_1, %c0_2] : memref<8x1xi32, #tpu.memory_space<vmem>>, vector<8x1xi32>
    %c8_i32 = arith.constant 8 : i32
    %2 = arith.muli %arg0, %c8_i32 : i32
    %3 = tpu.iota {dimensions = array<i32: 0>} : vector<8x1xi32>
    %4 = vector.broadcast %2 : i32 to vector<8x1xi32>
    %5 = arith.addi %4, %3 : vector<8x1xi32>
    %c20_i32 = arith.constant 20 : i32
    %6 = vector.broadcast %c20_i32 : i32 to vector<8x1xi32>
    %7 = arith.cmpi slt, %5, %6 : vector<8x1xi32>
    %8 = arith.mulf %0, %0 : vector<8x32xf32>
    %cst = arith.constant dense<0.000000e+00> : vector<8xf32>
    %9 = vector.multi_reduction <add>, %8, %cst [1] : vector<8x32xf32> to vector<8xf32>
    %10 = vector.shape_cast %9 : vector<8xf32> to vector<8x1xf32>
    %11 = math.sqrt %10 : vector<8x1xf32>
    %cst_3 = arith.constant 9.99999996E-13 : f32
    %12 = vector.broadcast %cst_3 : f32 to vector<8x1xf32>
    %13 = arith.maximumf %11, %12 : vector<8x1xf32>
    %cst_4 = arith.constant 1.000000e+00 : f32
    %14 = vector.broadcast %cst_4 : f32 to vector<8x1xf32>
    %15 = arith.divf %14, %13 : vector<8x1xf32>
    %16 = vector.broadcast %15 : vector<8x1xf32> to vector<8x32xf32>
    %17 = arith.mulf %0, %16 : vector<8x32xf32>
    %cst_5 = arith.constant 2.500000e+01 : f32
    %18 = vector.broadcast %cst_5 : f32 to vector<8x32xf32>
    %19 = arith.mulf %0, %18 : vector<8x32xf32>
    %cst_6 = arith.constant 1.000000e-07 : f32
    %20 = vector.broadcast %cst_6 : f32 to vector<8x32xf32>
    %21 = arith.addf %17, %20 : vector<8x32xf32>
    %22 = arith.divf %19, %21 : vector<8x32xf32>
    %cst_7 = arith.constant dense<0xFF800000> : vector<8xf32>
    %23 = vector.multi_reduction <maximumf>, %22, %cst_7 [1] : vector<8x32xf32> to vector<8xf32>
    %24 = vector.shape_cast %23 : vector<8xf32> to vector<8x1xf32>
    %25 = vector.broadcast %24 : vector<8x1xf32> to vector<8x32xf32>
    %26 = arith.subf %22, %25 : vector<8x32xf32>
    %27 = math.exp %26 : vector<8x32xf32>
    %cst_8 = arith.constant dense<0.000000e+00> : vector<8xf32>
    %28 = vector.multi_reduction <add>, %27, %cst_8 [1] : vector<8x32xf32> to vector<8xf32>
    %29 = vector.shape_cast %28 : vector<8xf32> to vector<8x1xf32>
    %30 = math.log %29 : vector<8x1xf32>
    %31 = arith.addf %24, %30 : vector<8x1xf32>
    %32 = tpu.iota {dimensions = array<i32: 1>} : vector<8x32xi32>
    %33 = vector.broadcast %1 : vector<8x1xi32> to vector<8x32xi32>
    %34 = arith.cmpi eq, %32, %33 : vector<8x32xi32>
    %cst_9 = arith.constant 0.000000e+00 : f32
    %35 = vector.broadcast %cst_9 : f32 to vector<8x32xf32>
    %36 = arith.select %34, %22, %35 : vector<8x32xi1>, vector<8x32xf32>
    %cst_10 = arith.constant dense<0.000000e+00> : vector<8xf32>
    %37 = vector.multi_reduction <add>, %36, %cst_10 [1] : vector<8x32xf32> to vector<8xf32>
    %38 = vector.shape_cast %37 : vector<8xf32> to vector<8x1xf32>
    %39 = arith.subf %31, %38 : vector<8x1xf32>
    %cst_11 = arith.constant 0.000000e+00 : f32
    %40 = vector.broadcast %cst_11 : f32 to vector<8x1xf32>
    %41 = arith.select %7, %39, %40 : vector<8x1xi1>, vector<8x1xf32>
    %c0_12 = arith.constant 0 : index
    %c0_13 = arith.constant 0 : index
    %42 = vector.load %arg3[%c0_12, %c0_13] : memref<8x1xf32, #tpu.memory_space<vmem>>, vector<8x1xf32>
    tpu.vector_store %arg3[%c0_12, %c0_13], %41 {strides = array<i32>} : memref<8x1xf32, #tpu.memory_space<vmem>>, vector<8x1xf32>,
    return
  }
  func.func @transform_0(%arg0: i32) -> (i32, i32) {
    %c0_i32 = arith.constant 0 : i32
    %c0_i32_0 = arith.constant 0 : i32
    return %arg0, %c0_i32 : i32, i32
  }
  func.func @transform_1(%arg0: i32) -> (i32, i32) {
    %c0_i32 = arith.constant 0 : i32
    %c0_i32_0 = arith.constant 0 : i32
    return %arg0, %c0_i32 : i32, i32
  }
  func.func @transform_2(%arg0: i32) -> (i32, i32) {
    %c0_i32 = arith.constant 0 : i32
    %c0_i32_0 = arith.constant 0 : i32
    return %arg0, %c0_i32 : i32, i32
  }
}

</mosaic_0001>

<llo_original>
// kernel: tpu_custom_call.1
$region0: #{tpu_custom_call.1}
  #allocation0 [shape = 'u32[]', space=smem, size = 0x4, offset = 0x4, fixed_abs, tag = 'smem constant byte address 0x4 - core index']
  #allocation1 [shape = 'u32[144,128]{1,0:T(1,128)}', space=vmem, size = 0x12000, scoped, tag = 'internal scratch']
  %s0 = inlined_call_operand.vmem [shape: f32[20,32], index: 0, kind: input, shape index: {}]
  %s1 = inlined_call_operand.vmem [shape: s32[20,1], index: 1, kind: input, shape index: {}]
  %s2 = inlined_call_operand.vmem [shape: f32[20,1], index: 2, kind: output, shape index: {}]
  %s3 = sld [smem:[#allocation0]]
  $region41: #{tpu_custom_call.1} parent=0
    _
  %s5 = ssub.s32 1, %s3
  %s6 = scalar_select 0, %s5, %s3
  loop: start=0, step=1, limit=5
  $region2: #{tpu_custom_call.1} parent=0 // loop_pre_header
    _
  $region3: #{tpu_custom_call.1} parent=0 // loop_header
    %s8 = sphi 0, %s12
    %p9 = scmp.ge.s32.totalorder %s8, 5
    %s18 = sphi 0, %s20
    %s21 = sphi 0, %s18
    %s22 = sphi 0, %s21
    %s38 = sphi 0, %s22
    %s44 = sphi 0, %s46
    %s47 = sphi 0, %s44
    %s48 = sphi 0, %s47
    %s64 = sphi 0, %s48
    %s70 = sphi 0, %s72
    %s73 = sphi 0, %s70
    %s74 = sphi 0, %s73
    %s90 = sphi 0, %s74
  $region4: #{tpu_custom_call.1} parent=0 // loop_header_branch
    %11 = sbr.rel (%p9) target = $region8
  $region5: #{tpu_custom_call.1} parent=0 // loop_body
    %s13 = ssub.s32 %s8, 1
    %s14 = ssub.s32 %s8, 2
    %s15 = sadd.s32 %s8, 1
    %s16 = ssub.s32 %s8, %s15
    %p17 = scmp.eq.s32.totalorder %s16, 0
    %s19 = sadd.s32 %s18, 1
    %s20 = scalar_select %p17, %s18, %s19
    %p23 = pneg %p17
    %p24 = scmp.eq.s32.totalorder %s8, 2
    %p25 = por %p23, %p24
    %p26 = scmp.ne.s32.totalorder %s18, %s21
    %p27 = scmp.eq.s32.totalorder %s8, 0
    %p28 = por %p26, %p27
    %p29 = scmp.ne.s32.totalorder %s18, %s21
    %p30 = scmp.eq.s32.totalorder %s13, 2
    %p31 = por %p29, %p30
    %p32 = scmp.ne.s32.totalorder %s21, %s22
    %p33 = scmp.eq.s32.totalorder %s13, 0
    %p34 = por %p32, %p33
    %p35 = scmp.ne.s32.totalorder %s21, %s22
    %p36 = scmp.eq.s32.totalorder %s14, 2
    %p37 = por %p35, %p36
    %p39 = scmp.ne.s32.totalorder %s22, %s38
    %p40 = scmp.eq.s32.totalorder %s14, 0
    %p41 = por %p39, %p40
    %s42 = ssub.s32 %s8, %s15
    %p43 = scmp.eq.s32.totalorder %s42, 0
    %s45 = sadd.s32 %s44, 1
    %s46 = scalar_select %p43, %s44, %s45
    %p49 = pneg %p43
    %p50 = scmp.eq.s32.totalorder %s8, 2
    %p51 = por %p49, %p50
    %p52 = scmp.ne.s32.totalorder %s44, %s47
    %p53 = scmp.eq.s32.totalorder %s8, 0
    %p54 = por %p52, %p53
    %p55 = scmp.ne.s32.totalorder %s44, %s47
    %p56 = scmp.eq.s32.totalorder %s13, 2
    %p57 = por %p55, %p56
    %p58 = scmp.ne.s32.totalorder %s47, %s48
    %p59 = scmp.eq.s32.totalorder %s13, 0
    %p60 = por %p58, %p59
    %p61 = scmp.ne.s32.totalorder %s47, %s48
    %p62 = scmp.eq.s32.totalorder %s14, 2
    %p63 = por %p61, %p62
    %p65 = scmp.ne.s32.totalorder %s48, %s64
    %p66 = scmp.eq.s32.totalorder %s14, 0
    %p67 = por %p65, %p66
    %s68 = ssub.s32 %s8, %s15
    %p69 = scmp.eq.s32.totalorder %s68, 0
    %s71 = sadd.s32 %s70, 1
    %s72 = scalar_select %p69, %s70, %s71
    %p75 = pneg %p69
    %p76 = scmp.eq.s32.totalorder %s8, 2
    %p77 = por %p75, %p76
    %p78 = scmp.ne.s32.totalorder %s70, %s73
    %p79 = scmp.eq.s32.totalorder %s8, 0
    %p80 = por %p78, %p79
    %p81 = scmp.ne.s32.totalorder %s70, %s73
    %p82 = scmp.eq.s32.totalorder %s13, 2
    %p83 = por %p81, %p82
    %p84 = scmp.ne.s32.totalorder %s73, %s74
    %p85 = scmp.eq.s32.totalorder %s13, 0
    %p86 = por %p84, %p85
    %p87 = scmp.ne.s32.totalorder %s73, %s74
    %p88 = scmp.eq.s32.totalorder %s14, 2
    %p89 = por %p87, %p88
    %p91 = scmp.ne.s32.totalorder %s74, %s90
    %p92 = scmp.eq.s32.totalorder %s14, 0
    %p93 = por %p91, %p92
    %p94 = scmp.le.s32.totalorder 1, %s8
    %p95 = scmp.lt.s32.totalorder %s8, 4
    %p96 = pnand %p94, %p95
    %p97 = pneg %p96
    // Predicated region
    $region9: #{tpu_custom_call.1} parent=5 // pred_check
      _
    $region10: #{tpu_custom_call.1} parent=5 // pred_check_branch
      %99 = sbr.rel (%p96) target = $region12
    $region11: #{tpu_custom_call.1} parent=5 // pred_region
      %s100 = ssub.s32 %s8, 1
    $region12: #{tpu_custom_call.1} parent=5 // pred_fallthru
      _
    %p101 = scmp.lt.s32.totalorder %s8, 3
    // Predicated region
    $region13: #{tpu_custom_call.1} parent=5 // pred_check
      %p102 = pneg %p101
    $region14: #{tpu_custom_call.1} parent=5 // pred_check_branch
      %104 = sbr.rel (%p102) target = $region16
    $region15: #{tpu_custom_call.1} parent=5 // pred_region
      // Predicated region
      $region17: #{tpu_custom_call.1} parent=15 // pred_check
        %p105 = pneg %p28
      $region18: #{tpu_custom_call.1} parent=15 // pred_check_branch
        %107 = sbr.rel (%p105) target = $region20
      $region19: #{tpu_custom_call.1} parent=15 // pred_region
        %p108 = scmp.lt.s32.totalorder %s8, 2
        %s109 = scalar_select %p108, %s8, 2
        %s110 = smul.addr %s109, 8
        %s111 = scalar_lea.vmem %s0, %s110
      $region20: #{tpu_custom_call.1} parent=15 // pred_fallthru
        _
      // Predicated region
      $region21: #{tpu_custom_call.1} parent=15 // pred_check
        %p112 = pneg %p54
      $region22: #{tpu_custom_call.1} parent=15 // pred_check_branch
        %114 = sbr.rel (%p112) target = $region24
      $region23: #{tpu_custom_call.1} parent=15 // pred_region
        %p115 = scmp.lt.s32.totalorder %s8, 2
        %s116 = scalar_select %p115, %s8, 2
        %s117 = smul.addr %s116, 8
        %s118 = scalar_lea.vmem %s1, %s117
      $region24: #{tpu_custom_call.1} parent=15 // pred_fallthru
        _
    $region16: #{tpu_custom_call.1} parent=5 // pred_fallthru
      _
    %p119 = scmp.le.s32.totalorder 1, %s8
    %p120 = scmp.lt.s32.totalorder %s8, 4
    %p121 = pnand %p119, %p120
    %p122 = pneg %p121
    // Predicated region
    $region25: #{tpu_custom_call.1} parent=5 // pred_check
      _
    $region26: #{tpu_custom_call.1} parent=5 // pred_check_branch
      %124 = sbr.rel (%p121) target = $region28
    $region27: #{tpu_custom_call.1} parent=5 // pred_region
      %s125 = ssub.s32 %s8, 1
      %p126 = scmp.lt.s32.totalorder %s13, 2
      %s127 = scalar_select %p126, %s13, 2
      %s128 = smul.addr %s127, 8
      %s129 = scalar_lea.vmem %s0, %s128
      %p130 = pneg %p34
      %p131 = pneg %p31
      %p132 = scmp.lt.s32.totalorder %s13, 2
      %s133 = scalar_select %p132, %s13, 2
      %s134 = smul.addr %s133, 8
      %s135 = scalar_lea.vmem %s1, %s134
      %p136 = pneg %p60
      %p137 = pneg %p57
      %p138 = pneg %p86
      %p139 = pneg %p83
      %p140 = scmp.lt.s32.totalorder %s13, 2
      %s141 = scalar_select %p140, %s13, 2
      %s142 = smul.addr %s141, 8
      %s143 = scalar_lea.vmem %s2, %s142
      %p144 = scmp.lt.s32.totalorder %s13, 2
      %s145 = scalar_select %p144, %s13, 2
      %s146 = smul.addr %s145, 8
      %s147 = scalar_lea.vmem %s0, %s146
      %p148 = scmp.lt.s32.totalorder %s13, 2
      %s149 = scalar_select %p148, %s13, 2
      %s150 = smul.addr %s149, 8
      %s151 = scalar_lea.vmem %s1, %s150
      %p152 = scmp.lt.s32.totalorder %s13, 2
      %s153 = scalar_select %p152, %s13, 2
      %s154 = smul.addr %s153, 8
      %s155 = scalar_lea.vmem %s2, %s154
      %v156 = vld [vmem:[%s147] sm:$0xff]
      %v157 = vld [vmem:[%s151] sm:$0xff]
      %s158 = smul.u32 %s13, 8
      %v159 = vlaneseq
      %v160 = vshrl.u32 %v159, 7
      %v161 = vstv %s158
      %v162 = vadd.s32 %v161, %v160
      %vm163 = vcmp.lt.s32.totalorder %v162, 20
      %v164 = vmul.f32 %v156, %v156
      %vm165 = vcmask 261120
      %v166 = vsel %vm165, %v164, 0.0
      %167 = vadd.xlane.f32.xlu0 %v166
      %v168 = vpop.xlane.xlu0 %167
      %v169 = vrsqrt.pop %v168
      %v170 = vmul.f32 %v168, %v169
      %vm171 = vcmp.eq.f32.partialorder %v168, inf
      %v172 = vsel %vm171, %v168, %v170
      %vm173 = vcmp.eq.f32.partialorder %v168, 0.0
      %v174 = vand.u32 %v168, 2147483648
      %v175 = vsel %vm173, %v174, %v172
      %v176 = vmax.f32 %v175, 1e-12
      %v177 = vrcp.pop %v176
      %v178 = vmul.f32 1.0, %v177
      %v179 = vmul.f32 %v156, %v178
      %v180 = vmul.f32 %v156, 25.0
      %v181 = vadd.f32 %v179, 1e-07
      %v182 = vrcp.pop %v181
      %v183 = vmul.f32 %v180, %v182
      %v184 = vsel %vm165, %v183, -inf
      %185 = vmax.xlane.f32.xlu0 %v184
      %v186 = vpop.xlane.xlu0 %185
      %v187 = vsub.f32 %v183, %v186
      %v188 = vmul.f32 %v187, 1.442695
      %v189 = vpow.pop %v188
      %v190 = vsel %vm165, %v189, 0.0
      %191 = vadd.xlane.f32.xlu0 %v190
      %v192 = vpop.xlane.xlu0 %191
      %v193 = vlog2.pop %v192
      %v194 = vmul.f32 %v193, 0.6931472
      %v195 = vadd.f32 %v186, %v194
      %v196 = vlaneseq
      %v197 = vand.u32 %v196, 127
      %198 = vset.pattern.permute.xlu0 0
      %199 = vperm.xlu0 %198, %v157
      %v200 = vpop.permute.xlu0 %199
      %vm201 = vcmp.eq.s32.totalorder %v197, %v200
      %v202 = vsel %vm201, %v183, 0.0
      %v203 = vsel %vm165, %v202, 0.0
      %204 = vadd.xlane.f32.xlu0 %v203
      %v205 = vpop.xlane.xlu0 %204
      %v206 = vsub.f32 %v195, %v205
      %v207 = vsel %vm163, %v206, 0.0
      %vm208 = vcmask 7168
      %209 = vst.msk [vmem:[%s155] sm:$0xff] %vm208, %v207
      %p210 = scmp.lt.s32.totalorder %s13, 2
      %s211 = scalar_select %p210, %s13, 2
      %s212 = smul.addr %s211, 8
      %s213 = scalar_lea.vmem %s2, %s212
      // Predicated region
      $region29: #{tpu_custom_call.1} parent=27 // pred_check
        %p214 = pneg %p83
      $region30: #{tpu_custom_call.1} parent=27 // pred_check_branch
        %216 = sbr.rel (%p214) target = $region32
      $region31: #{tpu_custom_call.1} parent=27 // pred_region
        _
      $region32: #{tpu_custom_call.1} parent=27 // pred_fallthru
        _
    $region28: #{tpu_custom_call.1} parent=5 // pred_fallthru
      _
    %p217 = scmp.le.s32.totalorder 2, %s8
    // Predicated region
    $region33: #{tpu_custom_call.1} parent=5 // pred_check
      %p218 = pneg %p217
    $region34: #{tpu_custom_call.1} parent=5 // pred_check_branch
      %220 = sbr.rel (%p218) target = $region36
    $region35: #{tpu_custom_call.1} parent=5 // pred_region
      %s221 = ssub.s32 %s8, 2
      // Predicated region
      $region37: #{tpu_custom_call.1} parent=35 // pred_check
        %p222 = pneg %p89
      $region38: #{tpu_custom_call.1} parent=35 // pred_check_branch
        %224 = sbr.rel (%p222) target = $region40
      $region39: #{tpu_custom_call.1} parent=35 // pred_region
        %p225 = scmp.lt.s32.totalorder %s14, 2
        %s226 = scalar_select %p225, %s14, 2
        %s227 = smul.addr %s226, 8
        %s228 = scalar_lea.vmem %s2, %s227
      $region40: #{tpu_custom_call.1} parent=35 // pred_fallthru
        _
    $region36: #{tpu_custom_call.1} parent=5 // pred_fallthru
      _
  $region6: #{tpu_custom_call.1} parent=0 // loop_footer
    %s12 = sadd.s32 1, %s8
  $region7: #{tpu_custom_call.1} parent=0 // loop_footer_branch
    %7 = sbr.rel target = $region3
  $region8: #{tpu_custom_call.1} parent=0 // loop_exit
    _

</llo_original>
